<compile_context>
chip_gen: v7x
topology: tpu7x:2x2x1
jax: 0.10.0
libtpu: 0.0.40
codegen_flags: <defaults>
</compile_context>

<pallas_src>
import functools

import jax
import jax.numpy as jnp
from jax.experimental import pallas as pl
from jax.experimental.pallas import tpu as pltpu  # noqa: F401  (TPU backend; no TPU-specific params needed at these sizes)


# ----------------------------------------------------------------------------
# Packed-weight layout helpers (one-time, off the hot path).
# ----------------------------------------------------------------------------
def _round8(n):
    return (n + 7) // 8 * 8


def _pack_offsets(feat_dim, embd_dim):
    """Row offsets of each parameter inside the packed [total, E] weight slab.
    Every piece starts on a multiple of 8 rows so the in-kernel static ref
    slices are sublane-tile aligned."""
    o_wT = 0
    o_b = _round8(feat_dim)
    o_w1T = o_b + 8
    o_b1 = o_w1T + _round8(embd_dim)
    o_w2 = o_b1 + 8
    total = o_w2 + 8
    return o_wT, o_b, o_w1T, o_b1, o_w2, total


def prepare_params(params):
    """Pack all weights/biases into one [total, E] operand: a single HBM->VMEM
    DMA per forward instead of six separate small DMAs."""
    E = params["ml_user_b"].shape[0]
    D = params["ml_user_w"].shape[1]
    o_wT, o_b, o_w1T, o_b1, o_w2, total = _pack_offsets(D, E)
    packed = jnp.zeros((total, E), jnp.float32)
    packed = packed.at[o_wT:o_wT + D].set(jnp.transpose(params["ml_user_w"]))      # [D, E]
    packed = packed.at[o_b].set(params["ml_user_b"])                               # [E]
    packed = packed.at[o_w1T:o_w1T + E].set(jnp.transpose(params["ml_social_w1"]))  # [E, E]
    packed = packed.at[o_b1].set(params["ml_social_b1"])                           # [E]
    packed = packed.at[o_w2].set(params["ml_social_w2"][0])                        # [E]
    return packed


# ----------------------------------------------------------------------------
# Fused kernel: masked-mean projection (1 MXU matmul over all B+B*S rows)
#               -> Q=1 attention (2 small matmuls, fully 2-D)
#               -> aggregate_rate on both embeddings (1 fused matmul).
# out_ref is [2, E]: row 0 = self output, row 1 = social output.
# ----------------------------------------------------------------------------
def _social_encoder_kernel(maskbd_ref, ui_ref, w_ref, out_ref, *, B, S, D, E, offs):
    o_wT, o_b, o_w1T, o_b1, o_w2, _ = offs
    BS = B * S

    # ---- masked item-history mean + user projection + relu -----------------
    # mask_bd is the pre-normalized block-diagonal mean operator [N, N*L]; a
    # single K=N*L MXU matmul replaces the previous ~18 tiny [1,L]@[L,D] dots.
    means = jnp.dot(maskbd_ref[...], ui_ref[...],
                    preferred_element_type=jnp.float32)                      # [N, D]
    wT = w_ref[o_wT:o_wT + D, :]                                             # [D, E]
    b = w_ref[o_b:o_b + 1, :]                                                # [1, E]
    proj = jnp.maximum(
        jnp.dot(means, wT, preferred_element_type=jnp.float32) + b, 0.0)     # [N, E]

    # social rows come first (B*S of them, sublane-aligned), self rows last.
    soc_e = proj[0:BS]                                                       # [B*S, E]
    self_e = proj[BS:BS + B]                                                 # [B, E]

    # ---- Q == 1 attention, kept 2-D -----------------------------------------
    # Full [B, B*S] logit matrix; only the m in [b*S, (b+1)*S) block is valid.
    logits = jnp.dot(self_e, soc_e.T, preferred_element_type=jnp.float32)    # [B, B*S]
    row_b = jax.lax.broadcasted_iota(jnp.int32, (B, BS), 0)
    col = jax.lax.broadcasted_iota(jnp.int32, (B, BS), 1)
    valid = (col >= row_b * S) & (col < (row_b + 1) * S)
    logits = jnp.where(valid, logits, -jnp.inf)
    logits = logits - jnp.max(logits, axis=1, keepdims=True)
    p = jnp.exp(logits)                                       # 0 on the masked entries
    att = p / jnp.sum(p, axis=1, keepdims=True)               # exact divide
    # off-block weights are exactly 0, so one dense matmul == per-batch bmm.
    soc_ctx = jnp.dot(att, soc_e, preferred_element_type=jnp.float32)        # [B, E]

    # ---- aggregate_rate on both embeddings (one fused matmul) ---------------
    w1T = w_ref[o_w1T:o_w1T + E, :]                                          # [E, E]
    b1 = w_ref[o_b1:o_b1 + 1, :]                                             # [1, E]
    w2 = w_ref[o_w2:o_w2 + 1, :]                                             # [1, E]

    x_both = jnp.concatenate([self_e, soc_ctx], axis=0)                      # [2B, E]
    trans = jnp.maximum(
        jnp.dot(x_both, w1T, preferred_element_type=jnp.float32) + b1, 0.0)  # [2B, E]
    scores = jnp.sum(trans * w2, axis=1, keepdims=True)                      # [2B, 1]

    def rate_weighted(scores_g, x_g):                  # softmax over the B rows
        s = scores_g - jnp.max(scores_g, axis=0, keepdims=True)
        pe = jnp.exp(s)
        wgt = pe / jnp.sum(pe, axis=0, keepdims=True)                        # [B, 1]
        return jnp.sum(wgt * x_g, axis=0, keepdims=True)                     # [1, E]

    # Store the two output rows directly (no in-kernel output concatenate).
    out_ref[0:1, :] = rate_weighted(scores[0:B], self_e)
    out_ref[1:2, :] = rate_weighted(scores[B:2 * B], soc_ctx)


# ----------------------------------------------------------------------------
# Full SocialEncoder forward (main path: social inputs provided, social_types>=2).
# ----------------------------------------------------------------------------
# TODO(synk): the social_types == 0 and social_users-is-None fallback branches of
#             the torch forward are not implemented (main two-output path only).
@jax.jit
def social_encoder_forward(packed_w, self_users, self_items, self_mask,
                           social_users, social_items, social_mask):
    B, s_self, L, Du = self_users.shape
    Di = self_items.shape[-1]
    S = social_users.shape[1]
    D = Du + Di
    E = packed_w.shape[-1]
    BS = B * S
    N = BS + B
    # torch.squeeze(self_embd, dim=1) in the module implies one self slot.
    assert s_self == 1

    # Wrapper-side packing: cat(users, items) on features, social rows first
    # then self rows, flattened to [N*L, D] (cheap fused XLA copies; saves 8
    # separate kernel DMAs and feeds a single full-K contraction).
    soc_ui = jnp.concatenate([social_users, social_items], axis=-1).reshape(BS, L, D)
    self_ui = jnp.concatenate([self_users, self_items], axis=-1).reshape(B, L, D)
    ui_flat = jnp.concatenate([soc_ui, self_ui], axis=0).reshape(N * L, D)

    # Block-diagonal masked-MEAN operator [N, N*L]; the dtype cast and the
    # 1/(len + 1e-4) normalization fuse into this one small XLA computation
    # (no standalone cast round-trip before the kernel).
    mask = jnp.concatenate([social_mask.reshape(BS, L),
                            self_mask.reshape(B, L)], axis=0).astype(jnp.float32)
    mask_n = mask / (jnp.sum(mask, axis=1, keepdims=True) + 0.0001)          # [N, L]
    mask_bd = (jnp.eye(N, dtype=jnp.float32)[:, :, None]
               * mask_n[None, :, :]).reshape(N, N * L)                       # [N, N*L]

    offs = _pack_offsets(D, E)
    kernel = functools.partial(_social_encoder_kernel,
                               B=B, S=S, D=D, E=E, offs=offs)

    # Single fused, grid-less kernel: the whole working set (~90 KB incl. VMEM
    # lane padding) is resident for the entire forward on every TPU generation
    # (well under v7x's 64 MiB per-TC VMEM), so no tiling is needed.
    # TODO(synk): if the serving path runs many SocialEncoder forwards, batch
    # them into one pallas_call with a leading "parallel" grid axis over the
    # request dimension so v7x's second TensorCore participates; a single
    # 18-row forward is launch/DMA-latency bound.
    out = pl.pallas_call(
        kernel,
        out_shape=jax.ShapeDtypeStruct((2, E), jnp.float32),
    )(mask_bd, ui_flat, packed_w)
    return out[0:1], out[1:2]


# ----------------------------------------------------------------------------
# Pure-JAX reference (mirrors the torch forward exactly), full-f32 dots so the
# comparison isolates kernel error rather than XLA's default bf16 matmuls.
# ----------------------------------------------------------------------------
def reference_forward(params, self_users, self_items, self_mask,
                      social_users, social_items, social_mask):
    hp = jax.lax.Precision.HIGHEST
    w, b = params["ml_user_w"], params["ml_user_b"]
    w1, b1, w2 = (params["ml_social_w1"], params["ml_social_b1"],
                  params["ml_social_w2"])

    def agg_items(users, items, mask):
        ui = jnp.concatenate([users, items], axis=-1) * mask[..., None]
        s = jnp.sum(ui, axis=2)
        ml = jnp.sum(mask, axis=2, keepdims=True) + 0.0001
        return s / ml

    def agg_rate(x):
        t = jax.nn.relu(jnp.dot(x, w1.T, precision=hp) + b1)
        a = jax.nn.softmax(jnp.dot(w2, t.T, precision=hp), axis=1)
        return jnp.dot(a, x, precision=hp)

    self_agg = agg_items(self_users, self_items, self_mask)          # [B,1,D]
    soc_agg = agg_items(social_users, social_items, social_mask)     # [B,S,D]
    self_e = jax.nn.relu(jnp.einsum("bqd,ed->bqe", self_agg, w, precision=hp) + b)
    soc_e = jax.nn.relu(jnp.einsum("bsd,ed->bse", soc_agg, w, precision=hp) + b)
    att = jax.nn.softmax(jnp.einsum("bqe,bse->bqs", self_e, soc_e, precision=hp), axis=2)
    soc_ctx = jnp.einsum("bqs,bse->bqe", att, soc_e, precision=hp)
    return agg_rate(self_e[:, 0, :]), agg_rate(soc_ctx[:, 0, :])


# ----------------------------------------------------------------------------
# Deterministic parameter / input construction and smoke test.
# ----------------------------------------------------------------------------
def xavier_normal(key, out_n, in_n):
    std = (2.0 / (in_n + out_n)) ** 0.5
    return std * jax.random.normal(key, (out_n, in_n), jnp.float32)


if __name__ == "__main__":
    # config: embedding_dim=32, use_fea_user=1, use_fea_item=1, use_coclick=1
    E = 32
    USE_FEA_USER, USE_FEA_ITEM = 1, 1
    B, S_SELF, S_SOC, L = 2, 1, 8, 8
    Du, Di = E * USE_FEA_USER, E * USE_FEA_ITEM

    key = jax.random.PRNGKey(0)
    keys = jax.random.split(key, 10)

    params = {
        "ml_user_w": xavier_normal(keys[0], E, Du + Di),      # [32, 64]
        "ml_user_b": jnp.zeros((E,), jnp.float32),
        "ml_social_w1": xavier_normal(keys[1], E, E),         # [32, 32]
        "ml_social_b1": jnp.zeros((E,), jnp.float32),
        "ml_social_w2": xavier_normal(keys[2], 1, E),         # [1, 32]
    }
    packed_w = prepare_params(params)                         # done once

    self_users = jax.random.normal(keys[3], (B, S_SELF, L, Du), jnp.float32)
    self_items = jax.random.normal(keys[4], (B, S_SELF, L, Di), jnp.float32)
    self_mask = (jax.random.uniform(keys[5], (B, S_SELF, L)) > 0.3).astype(jnp.float32)
    social_users = jax.random.normal(keys[6], (B, S_SOC, L, Du), jnp.float32)
    social_items = jax.random.normal(keys[7], (B, S_SOC, L, Di), jnp.float32)
    social_mask = (jax.random.uniform(keys[8], (B, S_SOC, L)) > 0.3).astype(jnp.float32)

    self_out, social_out = social_encoder_forward(
        packed_w, self_users, self_items, self_mask,
        social_users, social_items, social_mask)
    jax.block_until_ready((self_out, social_out))

    ref_self, ref_social = reference_forward(
        params, self_users, self_items, self_mask,
        social_users, social_items, social_mask)

    assert self_out.shape == (1, E) and social_out.shape == (1, E)
    # Tolerance: 100x tighter than the previous approx-reciprocal version (all
    # softmax normalizations are now exact divides); the remaining margin
    # covers the in-kernel MXU f32 pass decomposition / accumulation order vs.
    # the XLA HIGHEST-precision reference dots.
    assert jnp.allclose(self_out, ref_self, rtol=1e-4, atol=1e-4)
    assert jnp.allclose(social_out, ref_social, rtol=1e-4, atol=1e-4)

    print("KERNEL_OK")
</pallas_src>

<mosaic_0001>
module attributes {stable_mosaic.version = 11 : i64} {
  func.func @_social_encoder_kernel(%arg0: memref<18x144xf32, #tpu.memory_space<vmem>>, %arg1: memref<144x64xf32, #tpu.memory_space<vmem>>, %arg2: memref<120x32xf32, #tpu.memory_space<vmem>>, %arg3: memref<2x32xf32, #tpu.memory_space<vmem>>) attributes {dimension_semantics = [], scalar_prefetch = 0 : i64, scratch_operands = 0 : i64, tpu.core_type = #tpu.core_type<tc>} {
    %c0 = arith.constant 0 : index
    %c0_0 = arith.constant 0 : index
    %0 = vector.load %arg0[%c0, %c0_0] : memref<18x144xf32, #tpu.memory_space<vmem>>, vector<18x144xf32>
    %c0_1 = arith.constant 0 : index
    %c0_2 = arith.constant 0 : index
    %1 = vector.load %arg1[%c0_1, %c0_2] : memref<144x64xf32, #tpu.memory_space<vmem>>, vector<144x64xf32>
    %cst = arith.constant dense<0.000000e+00> : vector<18x64xf32>
    %2 = tpu.matmul %0, %1, %cst {dimension_numbers = #tpu.dot_dimension_numbers<[1], [0], [0], [1], [0, 0, 1, 1], [], []>} : vector<18x144xf32>, vector<144x64xf32>, vector<18x64xf32> -> vector<18x64xf32>
    %c0_3 = arith.constant 0 : index
    %c0_4 = arith.constant 0 : index
    %3 = vector.load %arg2[%c0_3, %c0_4] : memref<120x32xf32, #tpu.memory_space<vmem>>, vector<64x32xf32>
    %c64 = arith.constant 64 : index
    %c0_5 = arith.constant 0 : index
    %4 = vector.load %arg2[%c64, %c0_5] : memref<120x32xf32, #tpu.memory_space<vmem>>, vector<1x32xf32>
    %cst_6 = arith.constant dense<0.000000e+00> : vector<18x32xf32>
    %5 = tpu.matmul %2, %3, %cst_6 {dimension_numbers = #tpu.dot_dimension_numbers<[1], [0], [0], [1], [0, 0, 1, 1], [], []>} : vector<18x64xf32>, vector<64x32xf32>, vector<18x32xf32> -> vector<18x32xf32>
    %6 = vector.broadcast %4 : vector<1x32xf32> to vector<18x32xf32>
    %7 = arith.addf %5, %6 : vector<18x32xf32>
    %cst_7 = arith.constant 0.000000e+00 : f32
    %8 = vector.broadcast %cst_7 : f32 to vector<18x32xf32>
    %9 = arith.maximumf %7, %8 : vector<18x32xf32>
    %10 = vector.extract_strided_slice %9 {offsets = [0, 0], sizes = [16, 32], strides = [1, 1]} : vector<18x32xf32> to vector<16x32xf32>
    %11 = vector.extract_strided_slice %9 {offsets = [16, 0], sizes = [2, 32], strides = [1, 1]} : vector<18x32xf32> to vector<2x32xf32>
    %12 = tpu.transpose %10, [1, 0] : vector<16x32xf32> -> vector<32x16xf32>
    %cst_8 = arith.constant dense<0.000000e+00> : vector<2x16xf32>
    %13 = tpu.matmul %11, %12, %cst_8 {dimension_numbers = #tpu.dot_dimension_numbers<[1], [0], [0], [1], [0, 0, 1, 1], [], []>} : vector<2x32xf32>, vector<32x16xf32>, vector<2x16xf32> -> vector<2x16xf32>
    %14 = tpu.iota {dimensions = array<i32: 0>} : vector<2x16xi32>
    %15 = tpu.iota {dimensions = array<i32: 1>} : vector<2x16xi32>
    %c8_i32 = arith.constant 8 : i32
    %16 = vector.broadcast %c8_i32 : i32 to vector<2x16xi32>
    %17 = arith.muli %14, %16 : vector<2x16xi32>
    %18 = arith.cmpi sge, %15, %17 : vector<2x16xi32>
    %c1_i32 = arith.constant 1 : i32
    %19 = vector.broadcast %c1_i32 : i32 to vector<2x16xi32>
    %20 = arith.addi %14, %19 : vector<2x16xi32>
    %c8_i32_9 = arith.constant 8 : i32
    %21 = vector.broadcast %c8_i32_9 : i32 to vector<2x16xi32>
    %22 = arith.muli %20, %21 : vector<2x16xi32>
    %23 = arith.cmpi slt, %15, %22 : vector<2x16xi32>
    %24 = arith.andi %18, %23 : vector<2x16xi1>
    %cst_10 = arith.constant 0xFF800000 : f32
    %25 = vector.broadcast %cst_10 : f32 to vector<2x16xf32>
    %26 = arith.select %24, %13, %25 : vector<2x16xi1>, vector<2x16xf32>
    %cst_11 = arith.constant dense<0xFF800000> : vector<2xf32>
    %27 = vector.multi_reduction <maximumf>, %26, %cst_11 [1] : vector<2x16xf32> to vector<2xf32>
    %28 = vector.shape_cast %27 : vector<2xf32> to vector<2x1xf32>
    %29 = vector.broadcast %28 : vector<2x1xf32> to vector<2x16xf32>
    %30 = arith.subf %26, %29 : vector<2x16xf32>
    %31 = math.exp %30 : vector<2x16xf32>
    %cst_12 = arith.constant dense<0.000000e+00> : vector<2xf32>
    %32 = vector.multi_reduction <add>, %31, %cst_12 [1] : vector<2x16xf32> to vector<2xf32>
    %33 = vector.shape_cast %32 : vector<2xf32> to vector<2x1xf32>
    %34 = vector.broadcast %33 : vector<2x1xf32> to vector<2x16xf32>
    %35 = arith.divf %31, %34 : vector<2x16xf32>
    %cst_13 = arith.constant dense<0.000000e+00> : vector<2x32xf32>
    %36 = tpu.matmul %35, %10, %cst_13 {dimension_numbers = #tpu.dot_dimension_numbers<[1], [0], [0], [1], [0, 0, 1, 1], [], []>} : vector<2x16xf32>, vector<16x32xf32>, vector<2x32xf32> -> vector<2x32xf32>
    %c72 = arith.constant 72 : index
    %c0_14 = arith.constant 0 : index
    %37 = vector.load %arg2[%c72, %c0_14] : memref<120x32xf32, #tpu.memory_space<vmem>>, vector<32x32xf32>
    %c104 = arith.constant 104 : index
    %c0_15 = arith.constant 0 : index
    %38 = vector.load %arg2[%c104, %c0_15] : memref<120x32xf32, #tpu.memory_space<vmem>>, vector<1x32xf32>
    %c112 = arith.constant 112 : index
    %c0_16 = arith.constant 0 : index
    %39 = vector.load %arg2[%c112, %c0_16] : memref<120x32xf32, #tpu.memory_space<vmem>>, vector<1x32xf32>
    %40 = tpu.concatenate %11, %36 in 0 : vector<2x32xf32>, vector<2x32xf32> -> vector<4x32xf32>
    %cst_17 = arith.constant dense<0.000000e+00> : vector<4x32xf32>
    %41 = tpu.matmul %40, %37, %cst_17 {dimension_numbers = #tpu.dot_dimension_numbers<[1], [0], [0], [1], [0, 0, 1, 1], [], []>} : vector<4x32xf32>, vector<32x32xf32>, vector<4x32xf32> -> vector<4x32xf32>
    %42 = vector.broadcast %38 : vector<1x32xf32> to vector<4x32xf32>
    %43 = arith.addf %41, %42 : vector<4x32xf32>
    %cst_18 = arith.constant 0.000000e+00 : f32
    %44 = vector.broadcast %cst_18 : f32 to vector<4x32xf32>
    %45 = arith.maximumf %43, %44 : vector<4x32xf32>
    %46 = vector.broadcast %39 : vector<1x32xf32> to vector<4x32xf32>
    %47 = arith.mulf %45, %46 : vector<4x32xf32>
    %cst_19 = arith.constant dense<0.000000e+00> : vector<4xf32>
    %48 = vector.multi_reduction <add>, %47, %cst_19 [1] : vector<4x32xf32> to vector<4xf32>
    %49 = vector.shape_cast %48 : vector<4xf32> to vector<4x1xf32>
    %50 = vector.extract_strided_slice %49 {offsets = [0, 0], sizes = [2, 1], strides = [1, 1]} : vector<4x1xf32> to vector<2x1xf32>
    %cst_20 = arith.constant dense<0xFF800000> : vector<1xf32>
    %51 = vector.multi_reduction <maximumf>, %50, %cst_20 [0] : vector<2x1xf32> to vector<1xf32>
    %52 = vector.shape_cast %51 : vector<1xf32> to vector<1x1xf32>
    %53 = vector.broadcast %52 : vector<1x1xf32> to vector<2x1xf32>
    %54 = arith.subf %50, %53 : vector<2x1xf32>
    %55 = math.exp %54 : vector<2x1xf32>
    %cst_21 = arith.constant dense<0.000000e+00> : vector<1xf32>
    %56 = vector.multi_reduction <add>, %55, %cst_21 [0] : vector<2x1xf32> to vector<1xf32>
    %57 = vector.shape_cast %56 : vector<1xf32> to vector<1x1xf32>
    %58 = vector.broadcast %57 : vector<1x1xf32> to vector<2x1xf32>
    %59 = arith.divf %55, %58 : vector<2x1xf32>
    %60 = vector.broadcast %59 : vector<2x1xf32> to vector<2x32xf32>
    %61 = arith.mulf %60, %11 : vector<2x32xf32>
    %cst_22 = arith.constant dense<0.000000e+00> : vector<32xf32>
    %62 = vector.multi_reduction <add>, %61, %cst_22 [0] : vector<2x32xf32> to vector<32xf32>
    %63 = vector.shape_cast %62 : vector<32xf32> to vector<1x32xf32>
    %c0_23 = arith.constant 0 : index
    %c0_24 = arith.constant 0 : index
    %64 = vector.load %arg3[%c0_23, %c0_24] : memref<2x32xf32, #tpu.memory_space<vmem>>, vector<1x32xf32>
    tpu.vector_store %arg3[%c0_23, %c0_24], %63 {strides = array<i32>} : memref<2x32xf32, #tpu.memory_space<vmem>>, vector<1x32xf32>,
    %65 = vector.extract_strided_slice %49 {offsets = [2, 0], sizes = [2, 1], strides = [1, 1]} : vector<4x1xf32> to vector<2x1xf32>
    %cst_25 = arith.constant dense<0xFF800000> : vector<1xf32>
    %66 = vector.multi_reduction <maximumf>, %65, %cst_25 [0] : vector<2x1xf32> to vector<1xf32>
    %67 = vector.shape_cast %66 : vector<1xf32> to vector<1x1xf32>
    %68 = vector.broadcast %67 : vector<1x1xf32> to vector<2x1xf32>
    %69 = arith.subf %65, %68 : vector<2x1xf32>
    %70 = math.exp %69 : vector<2x1xf32>
    %cst_26 = arith.constant dense<0.000000e+00> : vector<1xf32>
    %71 = vector.multi_reduction <add>, %70, %cst_26 [0] : vector<2x1xf32> to vector<1xf32>
    %72 = vector.shape_cast %71 : vector<1xf32> to vector<1x1xf32>
    %73 = vector.broadcast %72 : vector<1x1xf32> to vector<2x1xf32>
    %74 = arith.divf %70, %73 : vector<2x1xf32>
    %75 = vector.broadcast %74 : vector<2x1xf32> to vector<2x32xf32>
    %76 = arith.mulf %75, %36 : vector<2x32xf32>
    %cst_27 = arith.constant dense<0.000000e+00> : vector<32xf32>
    %77 = vector.multi_reduction <add>, %76, %cst_27 [0] : vector<2x32xf32> to vector<32xf32>
    %78 = vector.shape_cast %77 : vector<32xf32> to vector<1x32xf32>
    %c1 = arith.constant 1 : index
    %c0_28 = arith.constant 0 : index
    %79 = vector.load %arg3[%c1, %c0_28] : memref<2x32xf32, #tpu.memory_space<vmem>>, vector<1x32xf32>
    tpu.vector_store %arg3[%c1, %c0_28], %78 {strides = array<i32>} : memref<2x32xf32, #tpu.memory_space<vmem>>, vector<1x32xf32>,
    return
  }
}

</mosaic_0001>

<llo_original>
// kernel: div.3
$region0: #{div.3}
  #allocation0 [shape = 's32[1]{0}', space=sflag, size = 0x4, scoped, tag = 'scoped memory for div.3']
  %s0 = inlined_call_operand.vmem [shape: f32[144], index: 0, kind: input, shape index: {}]
  %s1 = inlined_call_operand.vmem [shape: f32[144], index: 1, kind: input, shape index: {}]
  %s2 = inlined_call_operand.vmem [shape: f32[144], index: 2, kind: output, shape index: {}]
  %v3 = vld [vmem:[%s0] sm:$0x3]
  %v4 = vld [vmem:[%s1] sm:$0x3]
  %5 = xla_tuple %v3, %v4
  %6 = xla_tuple %5
  %v7 = vrcp.pop %v4
  %v8 = vmul.f32 %v3, %v7
  %9 = xla_tuple %v8
  %10 = vst [vmem:[%s2] sm:$0x3] %v8

// kernel: social_encoder_forward.1
$region0: #{social_encoder_forward.1}
  #allocation0 [shape = 'u32[]', space=smem, size = 0x4, offset = 0x4, fixed_abs, tag = 'smem constant byte address 0x4 - core index']
  #allocation1 [shape = 'u32[144,128]{1,0:T(1,128)}', space=vmem, size = 0x12000, scoped, tag = 'internal scratch']
  %s0 = inlined_call_operand.vmem [shape: f32[18,144], index: 0, kind: input, shape index: {}]
  %s1 = inlined_call_operand.vmem [shape: f32[144,64], index: 1, kind: input, shape index: {}]
  %s2 = inlined_call_operand.vmem [shape: f32[120,32], index: 2, kind: input, shape index: {}]
  %s3 = inlined_call_operand.vmem [shape: f32[2,32], index: 3, kind: output, shape index: {}]
  %s4 = sld [smem:[#allocation0]]
  $region22: #{social_encoder_forward.1} parent=0
    _
  %s6 = ssub.s32 1, %s4
  %s7 = scalar_select 0, %s6, %s4
  // Predicated region
  $region2: #{social_encoder_forward.1} parent=0 // pred_check
    _
  $region3: #{social_encoder_forward.1} parent=0 // pred_check_branch
    %9 = sbr.rel (0) target = $region5
  $region4: #{social_encoder_forward.1} parent=0 // pred_region
    _
  $region5: #{social_encoder_forward.1} parent=0 // pred_fallthru
    _
  // Predicated region
  $region6: #{social_encoder_forward.1} parent=0 // pred_check
    _
  $region7: #{social_encoder_forward.1} parent=0 // pred_check_branch
    %11 = sbr.rel (0) target = $region9
  $region8: #{social_encoder_forward.1} parent=0 // pred_region
    _
  $region9: #{social_encoder_forward.1} parent=0 // pred_fallthru
    _
  // Predicated region
  $region10: #{social_encoder_forward.1} parent=0 // pred_check
    _
  $region11: #{social_encoder_forward.1} parent=0 // pred_check_branch
    %13 = sbr.rel (0) target = $region13
  $region12: #{social_encoder_forward.1} parent=0 // pred_region
    _
  $region13: #{social_encoder_forward.1} parent=0 // pred_fallthru
    _
  %v14 = vld [vmem:[%s0] sm:$0xff]
  %v15 = vld [vmem:[%s0 + $0x8] sm:$0xff]
  %v16 = vld [vmem:[%s0 + $0x10] sm:$0xff]
  %v17 = vld [vmem:[%s0 + $0x18] sm:$0xff]
  %v18 = vld [vmem:[%s0 + $0x20] sm:$0x3]
  %v19 = vld [vmem:[%s0 + $0x28] sm:$0x3]
  %v20 = vld [vmem:[%s1] sm:$0xff]
  %v21 = vld [vmem:[%s1 + $0x8] sm:$0xff]
  %v22 = vld [vmem:[%s1 + $0x10] sm:$0xff]
  %v23 = vld [vmem:[%s1 + $0x18] sm:$0xff]
  %v24 = vld [vmem:[%s1 + $0x20] sm:$0xff]
  %v25 = vld [vmem:[%s1 + $0x28] sm:$0xff]
  %v26 = vld [vmem:[%s1 + $0x30] sm:$0xff]
  %v27 = vld [vmem:[%s1 + $0x38] sm:$0xff]
  %v28 = vld [vmem:[%s1 + $0x40] sm:$0xff]
  %v29 = vld [vmem:[%s1 + $0x48] sm:$0xff]
  %v30 = vld [vmem:[%s1 + $0x50] sm:$0xff]
  %v31 = vld [vmem:[%s1 + $0x58] sm:$0xff]
  %v32 = vld [vmem:[%s1 + $0x60] sm:$0xff]
  %v33 = vld [vmem:[%s1 + $0x68] sm:$0xff]
  %v34 = vld [vmem:[%s1 + $0x70] sm:$0xff]
  %v35 = vld [vmem:[%s1 + $0x78] sm:$0xff]
  %v36 = vld [vmem:[%s1 + $0x80] sm:$0xff]
  %v37 = vld [vmem:[%s1 + $0x88] sm:$0xff]
  %vm38 = vcmask 130048
  %v40 = vsel %vm38, %v15, 0
  %v43 = vsel %vm38, %v17, 0
  %v46 = vsel %vm38, %v19, 0
  %48 = vmatprep.subr.mxu0 0.0
  %49 = vmatpush1.msra.mxu0 %v20
  %50 = vmatprep.subr.mxu0 0.0
  %51 = vmatpush1.msra.mxu0 %v21
  %52 = vmatprep.subr.mxu0 0.0
  %53 = vmatpush1.msra.mxu0 %v22
  %54 = vmatprep.subr.mxu0 0.0
  %55 = vmatpush1.msra.mxu0 %v23
  %56 = vmatprep.subr.mxu0 0.0
  %57 = vmatpush1.msra.mxu0 %v24
  %58 = vmatprep.subr.mxu0 0.0
  %59 = vmatpush1.msra.mxu0 %v25
  %60 = vmatprep.subr.mxu0 0.0
  %61 = vmatpush1.msra.mxu0 %v26
  %62 = vmatprep.subr.mxu0 0.0
  %63 = vmatpush1.msra.mxu0 %v27
  %64 = vmatprep.subr.mxu0 0.0
  %65 = vmatpush1.msra.mxu0 %v28
  %66 = vmatprep.subr.mxu0 0.0
  %67 = vmatpush1.msra.mxu0 %v29
  %68 = vmatprep.subr.mxu0 0.0
  %69 = vmatpush1.msra.mxu0 %v30
  %70 = vmatprep.subr.mxu0 0.0
  %71 = vmatpush1.msra.mxu0 %v31
  %72 = vmatprep.subr.mxu0 0.0
  %73 = vmatpush1.msra.mxu0 %v32
  %74 = vmatprep.subr.mxu0 0.0
  %75 = vmatpush1.msra.mxu0 %v33
  %76 = vmatprep.subr.mxu0 0.0
  %77 = vmatpush1.msra.mxu0 %v34
  %78 = vmatprep.subr.mxu0 0.0
  %79 = vmatpush1.msra.mxu0 %v35
  %80 = vmatprep.subr.mxu0 0.0
  %81 = vmatpush1.msra.mxu0 %v36
  %82 = vmatprep.subr.mxu0 0.0
  %83 = vmatpush1.msra.mxu0 %v37
  %84 = vmatprep.subr.mxu0 0.0
  %85 = vmatpush1.msra.mxu0 0.0
  %86 = vmatprep.subr.mxu0 0.0
  %87 = vmatpush1.msra.mxu0 0.0
  %88 = vmatprep.subr.mxu0 0.0
  %89 = vmatpush1.msra.mxu0 0.0
  %90 = vmatprep.subr.mxu0 0.0
  %91 = vmatpush1.msra.mxu0 0.0
  %92 = vmatprep.subr.mxu0 0.0
  %93 = vmatpush1.msra.mxu0 0.0
  %94 = vmatprep.subr.mxu0 0.0
  %95 = vmatpush1.msra.mxu0 0.0
  %96 = vmatprep.subr.mxu0 0.0
  %97 = vmatpush1.msra.mxu0 0.0
  %98 = vmatprep.subr.mxu0 0.0
  %99 = vmatpush1.msra.mxu0 0.0
  %100 = vmatprep.subr.mxu0 0.0
  %101 = vmatpush1.msra.mxu0 0.0
  %102 = vmatprep.subr.mxu0 0.0
  %103 = vmatpush1.msra.mxu0 0.0
  %104 = vmatprep.subr.mxu0 0.0
  %105 = vmatpush1.msra.mxu0 0.0
  %106 = vmatprep.subr.mxu0 0.0
  %107 = vmatpush1.msra.mxu0 0.0
  %108 = vmatprep.subr.mxu0 0.0
  %109 = vmatpush1.msra.mxu0 0.0
  %110 = vmatprep.subr.mxu0 0.0
  %111 = vmatpush1.msra.mxu0 0.0
  %112 = vmatprep.mubr.f32.mxu0 %v40
  %113 = vmatmul.mubr.f32.gmra.mrb[0].mxu0 %v14
  %v114 = vpop.f32.mrb[0].mxu0
  %v115 = vadd.f32 0.0, %v114
  %v116 = vpop.f32.mrb[0].mxu0
  %117 = vmatprep.mubr.f32.mxu0 %v43
  %118 = vmatmul.mubr.f32.gmra.mrb[0].mxu0 %v16
  %v119 = vpop.f32.mrb[0].mxu0
  %v120 = vadd.f32 0.0, %v119
  %v121 = vpop.f32.mrb[0].mxu0
  %122 = vmatprep.mubr.f32.mxu0 %v46
  %123 = vmatmul.mubr.f32.gmra.mrb[0].mxu0 %v18
  %v124 = vpop.f32.mrb[0].mxu0
  %v125 = vadd.f32 0.0, %v124
  %v126 = vpop.f32.mrb[0].mxu0
  %127 = vdwg.mxu0
  %v128 = vld [vmem:[%s2] sm:$0xff]
  %v129 = vld [vmem:[%s2 + $0x8] sm:$0xff]
  %v130 = vld [vmem:[%s2 + $0x10] sm:$0xff]
  %v131 = vld [vmem:[%s2 + $0x18] sm:$0xff]
  %v132 = vld [vmem:[%s2 + $0x20] sm:$0xff]
  %v133 = vld [vmem:[%s2 + $0x28] sm:$0xff]
  %v134 = vld [vmem:[%s2 + $0x30] sm:$0xff]
  %v135 = vld [vmem:[%s2 + $0x38] sm:$0xff]
  %v136 = vld [vmem:[%s2 + $0x40] sm:$0x1]
  %v137 = vlaneseq
  %v138 = vshrl.u32 %v137, 7
  %v139 = vsub.s32 0, %v138
  %v140 = vrot.slane %v136, %v139
  %vm141 = vcmask 523264
  %v143 = vsel %vm141, %v115, 0
  %v146 = vsel %vm141, %v120, 0
  %v149 = vsel %vm141, %v125, 0
  %151 = vmatprep.subr.mxu0 0.0
  %152 = vmatpush1.msra.mxu0 %v128
  %153 = vmatprep.subr.mxu0 0.0
  %154 = vmatpush1.msra.mxu0 %v129
  %155 = vmatprep.subr.mxu0 0.0
  %156 = vmatpush1.msra.mxu0 %v130
  %157 = vmatprep.subr.mxu0 0.0
  %158 = vmatpush1.msra.mxu0 %v131
  %159 = vmatprep.subr.mxu0 0.0
  %160 = vmatpush1.msra.mxu0 %v132
  %161 = vmatprep.subr.mxu0 0.0
  %162 = vmatpush1.msra.mxu0 %v133
  %163 = vmatprep.subr.mxu0 0.0
  %164 = vmatpush1.msra.mxu0 %v134
  %165 = vmatprep.subr.mxu0 0.0
  %166 = vmatpush1.msra.mxu0 %v135
  %167 = vmatprep.subr.mxu0 0.0
  %168 = vmatpush1.msra.mxu0 0.0
  %169 = vmatprep.subr.mxu0 0.0
  %170 = vmatpush1.msra.mxu0 0.0
  %171 = vmatprep.subr.mxu0 0.0
  %172 = vmatpush1.msra.mxu0 0.0
  %173 = vmatprep.subr.mxu0 0.0
  %174 = vmatpush1.msra.mxu0 0.0
  %175 = vmatprep.subr.mxu0 0.0
  %176 = vmatpush1.msra.mxu0 0.0
  %177 = vmatprep.subr.mxu0 0.0
  %178 = vmatpush1.msra.mxu0 0.0
  %179 = vmatprep.subr.mxu0 0.0
  %180 = vmatpush1.msra.mxu0 0.0
  %181 = vmatprep.subr.mxu0 0.0
  %182 = vmatpush1.msra.mxu0 0.0
  %183 = vmatprep.subr.mxu0 0.0
  %184 = vmatpush1.msra.mxu0 0.0
  %185 = vmatprep.subr.mxu0 0.0
  %186 = vmatpush1.msra.mxu0 0.0
  %187 = vmatprep.subr.mxu0 0.0
  %188 = vmatpush1.msra.mxu0 0.0
  %189 = vmatprep.subr.mxu0 0.0
  %190 = vmatpush1.msra.mxu0 0.0
  %191 = vmatprep.subr.mxu0 0.0
  %192 = vmatpush1.msra.mxu0 0.0
  %193 = vmatprep.subr.mxu0 0.0
  %194 = vmatpush1.msra.mxu0 0.0
  %195 = vmatprep.subr.mxu0 0.0
  %196 = vmatpush1.msra.mxu0 0.0
  %197 = vmatprep.subr.mxu0 0.0
  %198 = vmatpush1.msra.mxu0 0.0
  %199 = vmatprep.subr.mxu0 0.0
  %200 = vmatpush1.msra.mxu0 0.0
  %201 = vmatprep.subr.mxu0 0.0
  %202 = vmatpush1.msra.mxu0 0.0
  %203 = vmatprep.subr.mxu0 0.0
  %204 = vmatpush1.msra.mxu0 0.0
  %205 = vmatprep.subr.mxu0 0.0
  %206 = vmatpush1.msra.mxu0 0.0
  %207 = vmatprep.subr.mxu0 0.0
  %208 = vmatpush1.msra.mxu0 0.0
  %209 = vmatprep.subr.mxu0 0.0
  %210 = vmatpush1.msra.mxu0 0.0
  %211 = vmatprep.subr.mxu0 0.0
  %212 = vmatpush1.msra.mxu0 0.0
  %213 = vmatprep.subr.mxu0 0.0
  %214 = vmatpush1.msra.mxu0 0.0
  %215 = vmatprep.mubr.f32.mxu0 0.0
  %216 = vmatmul.mubr.f32.gmra.mrb[0].mxu0 %v143
  %v217 = vpop.f32.mrb[0].mxu0
  %v218 = vadd.f32 %v140, %v217
  %v219 = vpop.f32.mrb[0].mxu0
  %220 = vmatprep.mubr.f32.mxu0 0.0
  %221 = vmatmul.mubr.f32.gmra.mrb[0].mxu0 %v146
  %v222 = vpop.f32.mrb[0].mxu0
  %v223 = vadd.f32 %v140, %v222
  %v224 = vpop.f32.mrb[0].mxu0
  %225 = vmatprep.mubr.f32.mxu0 0.0
  %226 = vmatmul.mubr.f32.gmra.mrb[0].mxu0 %v149
  %v227 = vpop.f32.mrb[0].mxu0
  %v228 = vadd.f32 %v140, %v227
  %v229 = vpop.f32.mrb[0].mxu0
  %230 = vdwg.mxu0
  %v231 = vmax.f32 %v218, 0.0
  %v232 = vmax.f32 %v223, 0.0
  %v233 = vmax.f32 %v228, 0.0
  %vm234 = vcmask 261120
  %v236 = vsel %vm234, %v233, 0
  %v239 = vsel %vm234, %v231, 0
  %v242 = vsel %vm234, %v232, 0
  %244 = vmatprep.subr.mxu0 0.0
  %245 = vmatpush1.xpose.msra.mxu0 %v239
  %246 = vmatprep.subr.mxu0 0.0
  %247 = vmatpush1.xpose.msra.mxu0 %v242
  %248 = vmatprep.subr.mxu0 0.0
  %249 = vmatpush1.xpose.msra.mxu0 0.0
  %250 = vmatprep.subr.mxu0 0.0
  %251 = vmatpush1.xpose.msra.mxu0 0.0
  %252 = vmatprep.subr.mxu0 0.0
  %253 = vmatpush1.xpose.msra.mxu0 0.0
  %254 = vmatprep.subr.mxu0 0.0
  %255 = vmatpush1.xpose.msra.mxu0 0.0
  %256 = vmatprep.subr.mxu0 0.0
  %257 = vmatpush1.xpose.msra.mxu0 0.0
  %258 = vmatprep.subr.mxu0 0.0
  %259 = vmatpush1.xpose.msra.mxu0 0.0
  %260 = vmatprep.subr.mxu0 0.0
  %261 = vmatpush1.xpose.msra.mxu0 0.0
  %262 = vmatprep.subr.mxu0 0.0
  %263 = vmatpush1.xpose.msra.mxu0 0.0
  %264 = vmatprep.subr.mxu0 0.0
  %265 = vmatpush1.xpose.msra.mxu0 0.0
  %266 = vmatprep.subr.mxu0 0.0
  %267 = vmatpush1.xpose.msra.mxu0 0.0
  %268 = vmatprep.subr.mxu0 0.0
  %269 = vmatpush1.xpose.msra.mxu0 0.0
  %270 = vmatprep.subr.mxu0 0.0
  %271 = vmatpush1.xpose.msra.mxu0 0.0
  %272 = vmatprep.subr.mxu0 0.0
  %273 = vmatpush1.xpose.msra.mxu0 0.0
  %274 = vmatprep.subr.mxu0 0.0
  %275 = vmatpush1.xpose.msra.mxu0 0.0
  %276 = vmatprep.subr.mxu0 0.0
  %277 = vmatpush1.xpose.msra.mxu0 0.0
  %278 = vmatprep.subr.mxu0 0.0
  %279 = vmatpush1.xpose.msra.mxu0 0.0
  %280 = vmatprep.subr.mxu0 0.0
  %281 = vmatpush1.xpose.msra.mxu0 0.0
  %282 = vmatprep.subr.mxu0 0.0
  %283 = vmatpush1.xpose.msra.mxu0 0.0
  %284 = vmatprep.subr.mxu0 0.0
  %285 = vmatpush1.xpose.msra.mxu0 0.0
  %286 = vmatprep.subr.mxu0 0.0
  %287 = vmatpush1.xpose.msra.mxu0 0.0
  %288 = vmatprep.subr.mxu0 0.0
  %289 = vmatpush1.xpose.msra.mxu0 0.0
  %290 = vmatprep.subr.mxu0 0.0
  %291 = vmatpush1.xpose.msra.mxu0 0.0
  %292 = vmatprep.subr.mxu0 0.0
  %293 = vmatpush1.xpose.msra.mxu0 0.0
  %294 = vmatprep.subr.mxu0 0.0
  %295 = vmatpush1.xpose.msra.mxu0 0.0
  %296 = vmatprep.subr.mxu0 0.0
  %297 = vmatpush1.xpose.msra.mxu0 0.0
  %298 = vmatprep.subr.mxu0 0.0
  %299 = vmatpush1.xpose.msra.mxu0 0.0
  %300 = vmatprep.subr.mxu0 0.0
  %301 = vmatpush1.xpose.msra.mxu0 0.0
  %302 = vmatprep.subr.mxu0 0.0
  %303 = vmatpush1.xpose.msra.mxu0 0.0
  %304 = vmatprep.subr.mxu0 0.0
  %305 = vmatpush1.xpose.msra.mxu0 0.0
  %306 = vmatprep.subr.mxu0 0.0
  %307 = vmatpush1.xpose.msra.mxu0 0.0
  %308 = vmatprep.mubr.f32.mxu0 0.0
  %309 = vmatmul.mubr.f32.gmra.mrb[0].mxu0 %v236
  %v310 = vpop.f32.mrb[0].mxu0
  %v311 = vadd.f32 0.0, %v310
  %v312 = vpop.f32.mrb[0].mxu0
  %313 = vdwg.mxu0
  %v314 = vlaneseq
  %v315 = vshrl.u32 %v314, 7
  %v316 = vlaneseq
  %v317 = vand.u32 %v316, 127
  %v318 = vmul.u32 %v315, 8
  %vm319 = vcmp.ge.s32.totalorder %v317, %v318
  %v320 = vadd.s32 %v315, 1
  %v321 = vmul.u32 %v320, 8
  %vm322 = vcmp.lt.s32.totalorder %v317, %v321
  %vm323 = vmand %vm319, %vm322
  %v324 = vsel %vm323, %v311, -inf
  %vm325 = vcmask 123904
  %v326 = vsel %vm325, %v324, -inf
  %327 = vmax.xlane.f32.xlu0 %v326
  %v328 = vpop.xlane.xlu0 %327
  %v329 = vsub.f32 %v324, %v328
  %v330 = vmul.f32 %v329, 1.442695
  %v331 = vpow.pop %v330
  %v332 = vsel %vm325, %v331, 0.0
  %333 = vadd.xlane.f32.xlu0 %v332
  %v334 = vpop.xlane.xlu0 %333
  %v335 = vrcp.pop %v334
  %v336 = vmul.f32 %v331, %v335
  %v338 = vsel %vm38, %v336, 0
  %340 = vmatprep.subr.mxu0 0.0
  %341 = vmatpush1.msra.mxu0 %v231
  %342 = vmatprep.subr.mxu0 0.0
  %343 = vmatpush1.msra.mxu0 %v232
  %344 = vmatprep.subr.mxu0 0.0
  %345 = vmatpush1.msra.mxu0 0.0
  %346 = vmatprep.subr.mxu0 0.0
  %347 = vmatpush1.msra.mxu0 0.0
  %348 = vmatprep.subr.mxu0 0.0
  %349 = vmatpush1.msra.mxu0 0.0
  %350 = vmatprep.subr.mxu0 0.0
  %351 = vmatpush1.msra.mxu0 0.0
  %352 = vmatprep.subr.mxu0 0.0
  %353 = vmatpush1.msra.mxu0 0.0
  %354 = vmatprep.subr.mxu0 0.0
  %355 = vmatpush1.msra.mxu0 0.0
  %356 = vmatprep.subr.mxu0 0.0
  %357 = vmatpush1.msra.mxu0 0.0
  %358 = vmatprep.subr.mxu0 0.0
  %359 = vmatpush1.msra.mxu0 0.0
  %360 = vmatprep.subr.mxu0 0.0
  %361 = vmatpush1.msra.mxu0 0.0
  %362 = vmatprep.subr.mxu0 0.0
  %363 = vmatpush1.msra.mxu0 0.0
  %364 = vmatprep.subr.mxu0 0.0
  %365 = vmatpush1.msra.mxu0 0.0
  %366 = vmatprep.subr.mxu0 0.0
  %367 = vmatpush1.msra.mxu0 0.0
  %368 = vmatprep.subr.mxu0 0.0
  %369 = vmatpush1.msra.mxu0 0.0
  %370 = vmatprep.subr.mxu0 0.0
  %371 = vmatpush1.msra.mxu0 0.0
  %372 = vmatprep.subr.mxu0 0.0
  %373 = vmatpush1.msra.mxu0 0.0
  %374 = vmatprep.subr.mxu0 0.0
  %375 = vmatpush1.msra.mxu0 0.0
  %376 = vmatprep.subr.mxu0 0.0
  %377 = vmatpush1.msra.mxu0 0.0
  %378 = vmatprep.subr.mxu0 0.0
  %379 = vmatpush1.msra.mxu0 0.0
  %380 = vmatprep.subr.mxu0 0.0
  %381 = vmatpush1.msra.mxu0 0.0
  %382 = vmatprep.subr.mxu0 0.0
  %383 = vmatpush1.msra.mxu0 0.0
  %384 = vmatprep.subr.mxu0 0.0
  %385 = vmatpush1.msra.mxu0 0.0
  %386 = vmatprep.subr.mxu0 0.0
  %387 = vmatpush1.msra.mxu0 0.0
  %388 = vmatprep.subr.mxu0 0.0
  %389 = vmatpush1.msra.mxu0 0.0
  %390 = vmatprep.subr.mxu0 0.0
  %391 = vmatpush1.msra.mxu0 0.0
  %392 = vmatprep.subr.mxu0 0.0
  %393 = vmatpush1.msra.mxu0 0.0
  %394 = vmatprep.subr.mxu0 0.0
  %395 = vmatpush1.msra.mxu0 0.0
  %396 = vmatprep.subr.mxu0 0.0
  %397 = vmatpush1.msra.mxu0 0.0
  %398 = vmatprep.subr.mxu0 0.0
  %399 = vmatpush1.msra.mxu0 0.0
  %400 = vmatprep.subr.mxu0 0.0
  %401 = vmatpush1.msra.mxu0 0.0
  %402 = vmatprep.subr.mxu0 0.0
  %403 = vmatpush1.msra.mxu0 0.0
  %404 = vmatprep.mubr.f32.mxu0 0.0
  %405 = vmatmul.mubr.f32.gmra.mrb[0].mxu0 %v338
  %v406 = vpop.f32.mrb[0].mxu0
  %v407 = vadd.f32 0.0, %v406
  %v408 = vpop.f32.mrb[0].mxu0
  %409 = vdwg.mxu0
  %v410 = vld [vmem:[%s2 + $0x48] sm:$0xff]
  %v411 = vld [vmem:[%s2 + $0x50] sm:$0xff]
  %v412 = vld [vmem:[%s2 + $0x58] sm:$0xff]
  %v413 = vld [vmem:[%s2 + $0x60] sm:$0xff]
  %v414 = vld [vmem:[%s2 + $0x68] sm:$0x1]
  %v415 = vld [vmem:[%s2 + $0x70] sm:$0x1]
  %v417 = vrot.slane %v407, 6
  %vm419 = vcmask 1041408
  %v420 = vsel %vm419, %v233, %v417
  %v421 = vlaneseq
  %v422 = vshrl.u32 %v421, 7
  %v423 = vsub.s32 0, %v422
  %v424 = vrot.slane %v414, %v423
  %v426 = vsel %vm234, %v420, 0
  %428 = vmatprep.subr.mxu0 0.0
  %429 = vmatpush1.msra.mxu0 %v410
  %430 = vmatprep.subr.mxu0 0.0
  %431 = vmatpush1.msra.mxu0 %v411
  %432 = vmatprep.subr.mxu0 0.0
  %433 = vmatpush1.msra.mxu0 %v412
  %434 = vmatprep.subr.mxu0 0.0
  %435 = vmatpush1.msra.mxu0 %v413
  %436 = vmatprep.subr.mxu0 0.0
  %437 = vmatpush1.msra.mxu0 0.0
  %438 = vmatprep.subr.mxu0 0.0
  %439 = vmatpush1.msra.mxu0 0.0
  %440 = vmatprep.subr.mxu0 0.0
  %441 = vmatpush1.msra.mxu0 0.0
  %442 = vmatprep.subr.mxu0 0.0
  %443 = vmatpush1.msra.mxu0 0.0
  %444 = vmatprep.subr.mxu0 0.0
  %445 = vmatpush1.msra.mxu0 0.0
  %446 = vmatprep.subr.mxu0 0.0
  %447 = vmatpush1.msra.mxu0 0.0
  %448 = vmatprep.subr.mxu0 0.0
  %449 = vmatpush1.msra.mxu0 0.0
  %450 = vmatprep.subr.mxu0 0.0
  %451 = vmatpush1.msra.mxu0 0.0
  %452 = vmatprep.subr.mxu0 0.0
  %453 = vmatpush1.msra.mxu0 0.0
  %454 = vmatprep.subr.mxu0 0.0
  %455 = vmatpush1.msra.mxu0 0.0
  %456 = vmatprep.subr.mxu0 0.0
  %457 = vmatpush1.msra.mxu0 0.0
  %458 = vmatprep.subr.mxu0 0.0
  %459 = vmatpush1.msra.mxu0 0.0
  %460 = vmatprep.subr.mxu0 0.0
  %461 = vmatpush1.msra.mxu0 0.0
  %462 = vmatprep.subr.mxu0 0.0
  %463 = vmatpush1.msra.mxu0 0.0
  %464 = vmatprep.subr.mxu0 0.0
  %465 = vmatpush1.msra.mxu0 0.0
  %466 = vmatprep.subr.mxu0 0.0
  %467 = vmatpush1.msra.mxu0 0.0
  %468 = vmatprep.subr.mxu0 0.0
  %469 = vmatpush1.msra.mxu0 0.0
  %470 = vmatprep.subr.mxu0 0.0
  %471 = vmatpush1.msra.mxu0 0.0
  %472 = vmatprep.subr.mxu0 0.0
  %473 = vmatpush1.msra.mxu0 0.0
  %474 = vmatprep.subr.mxu0 0.0
  %475 = vmatpush1.msra.mxu0 0.0
  %476 = vmatprep.subr.mxu0 0.0
  %477 = vmatpush1.msra.mxu0 0.0
  %478 = vmatprep.subr.mxu0 0.0
  %479 = vmatpush1.msra.mxu0 0.0
  %480 = vmatprep.subr.mxu0 0.0
  %481 = vmatpush1.msra.mxu0 0.0
  %482 = vmatprep.subr.mxu0 0.0
  %483 = vmatpush1.msra.mxu0 0.0
  %484 = vmatprep.subr.mxu0 0.0
  %485 = vmatpush1.msra.mxu0 0.0
  %486 = vmatprep.subr.mxu0 0.0
  %487 = vmatpush1.msra.mxu0 0.0
  %488 = vmatprep.subr.mxu0 0.0
  %489 = vmatpush1.msra.mxu0 0.0
  %490 = vmatprep.subr.mxu0 0.0
  %491 = vmatpush1.msra.mxu0 0.0
  %492 = vmatprep.mubr.f32.mxu0 0.0
  %493 = vmatmul.mubr.f32.gmra.mrb[0].mxu0 %v426
  %v494 = vpop.f32.mrb[0].mxu0
  %v495 = vadd.f32 %v424, %v494
  %v496 = vpop.f32.mrb[0].mxu0
  %497 = vdwg.mxu0
  %v498 = vmax.f32 %v495, 0.0
  %v499 = vlaneseq
  %v500 = vshrl.u32 %v499, 7
  %v501 = vsub.s32 0, %v500
  %v502 = vrot.slane %v415, %v501
  %v503 = vmul.f32 %v498, %v502
  %vm504 = vcmask 257024
  %v505 = vsel %vm504, %v503, 0.0
  %506 = vadd.xlane.f32.xlu0 %v505
  %v507 = vpop.xlane.xlu0 %506
  %v508 = vsel %vm419, %v507, -inf
  %v509 = vrot.slane %v508, 4
  %v510 = vmax.f32 %v508, %v509
  %v511 = vrot.slane %v510, 2
  %v512 = vmax.f32 %v510, %v511
  %v513 = vrot.slane %v512, 1
  %v514 = vmax.f32 %v512, %v513
  %v515 = vsub.f32 %v507, %v514
  %v516 = vmul.f32 %v515, 1.442695
  %v517 = vpow.pop %v516
  %v518 = vsel %vm419, %v517, 0.0
  %v519 = vrot.slane %v518, 4
  %v520 = vadd.f32 %v518, %v519
  %v521 = vrot.slane %v520, 2
  %v522 = vadd.f32 %v520, %v521
  %v523 = vrot.slane %v522, 1
  %v524 = vadd.f32 %v522, %v523
  %v525 = vrcp.pop %v524
  %v526 = vmul.f32 %v517, %v525
  %v527 = vmul.f32 %v526, %v233
  %vm528 = vcmask 254976
  %v529 = vsel %vm528, %v527, 0.0
  %v530 = vrot.slane %v529, 4
  %v531 = vadd.f32 %v529, %v530
  %v532 = vrot.slane %v531, 2
  %v533 = vadd.f32 %v531, %v532
  %v534 = vrot.slane %v533, 1
  %v535 = vadd.f32 %v533, %v534
  %vm536 = vcmask 253952
  %537 = vst.msk [vmem:[%s3] sm:$0x1] %vm536, %v535
  %vm538 = vcmask 1043458
  %v539 = vsel %vm538, %v507, -inf
  %v540 = vrot.slane %v539, 4
  %v541 = vmax.f32 %v539, %v540
  %v542 = vrot.slane %v541, 2
  %v543 = vmax.f32 %v541, %v542
  %v544 = vrot.slane %v543, 1
  %v545 = vmax.f32 %v543, %v544
  %v546 = vsub.f32 %v507, %v545
  %v547 = vmul.f32 %v546, 1.442695
  %v548 = vpow.pop %v547
  %v550 = vrot.slane %v548, 2
  %v552 = vsel %vm419, %v550, 0.0
  %v553 = vrot.slane %v552, 4
  %v554 = vadd.f32 %v552, %v553
  %v555 = vrot.slane %v554, 2
  %v556 = vadd.f32 %v554, %v555
  %v557 = vrot.slane %v556, 1
  %v558 = vadd.f32 %v556, %v557
  %v559 = vrcp.pop %v558
  %v560 = vmul.f32 %v548, %v559
  %v561 = vmul.f32 %v560, %v417
  %v563 = vrot.slane %v561, 2
  %v565 = vsel %vm528, %v563, 0.0
  %v566 = vrot.slane %v565, 4
  %v567 = vadd.f32 %v565, %v566
  %v568 = vrot.slane %v567, 2
  %v569 = vadd.f32 %v567, %v568
  %v570 = vrot.slane %v569, 1
  %v571 = vadd.f32 %v569, %v570
  %572 = vst.msk [vmem:[%s3 + $0x1] sm:$0x1] %vm536, %v571
  // Predicated region
  $region14: #{social_encoder_forward.1} parent=0 // pred_check
    _
  $region15: #{social_encoder_forward.1} parent=0 // pred_check_branch
    %574 = sbr.rel (0) target = $region17
  $region16: #{social_encoder_forward.1} parent=0 // pred_region
    _
  $region17: #{social_encoder_forward.1} parent=0 // pred_fallthru
    _
  // Predicated region
  $region18: #{social_encoder_forward.1} parent=0 // pred_check
    _
  $region19: #{social_encoder_forward.1} parent=0 // pred_check_branch
    %576 = sbr.rel (0) target = $region21
  $region20: #{social_encoder_forward.1} parent=0 // pred_region
    _
  $region21: #{social_encoder_forward.1} parent=0 // pred_fallthru
    _

</llo_original>
